<compile_context>
chip_gen: v7x
topology: tpu7x:2x2x1
jax: 0.10.0
libtpu: 0.0.40
codegen_flags: <defaults>
</compile_context>

<pallas_src>
import jax
import jax.numpy as jnp
from jax.experimental import pallas as pl
from jax.experimental.pallas import tpu as pltpu


def _round_up(x, m):
    return ((x + m - 1) // m) * m


def _sum_rate_kernel(noise_ref, hv_ref, rate_ref):
    # noise_ref : SMEM (1,)  scalar-prefetch noise power
    # hv_ref    : VMEM [4, K, M, TN]  stacked (Hr, Hi, Vr, Vi); batch on lanes
    # rate_ref  : VMEM [1, 1, TN]     per-row sum-rate for this batch tile
    K = hv_ref.shape[1]
    tn = rate_ref.shape[-1]
    noise = noise_ref[0]

    # Hoist beamformer slices out of the k1 x k2 double loop: each user's V
    # tile is read once per grid step and reused (K loads instead of K^2).
    vr = [hv_ref[2, k, :, :] for k in range(K)]   # each [M, TN]
    vi = [hv_ref[3, k, :, :] for k in range(K)]

    total = jnp.zeros((1, tn), dtype=jnp.float32)

    # K is small and static -> fully unrolled VPU hot path.
    for k1 in range(K):
        hr = hv_ref[0, k1, :, :]                  # [M, TN]
        hi = hv_ref[1, k1, :, :]                  # [M, TN]
        nom = None
        power_sum = None
        for k2 in range(K):
            re = jnp.sum(hr * vr[k2] - hi * vi[k2], axis=0, keepdims=True)  # [1, TN]
            im = jnp.sum(hr * vi[k2] + hi * vr[k2], axis=0, keepdims=True)  # [1, TN]
            p = re * re + im * im                                           # [1, TN]
            if k1 == k2:
                nom = p
            power_sum = p if power_sum is None else power_sum + p
        denom = power_sum - nom + noise            # interference + noise (added once)
        total = total + jnp.log2(1.0 + nom / denom)

    rate_ref[0, :, :] = total


def sum_rate_loss(H_real, H_imag, V_real, V_imag, noise_power):
    """Inputs follow the PyTorch convention: H/V are [N, M, K]; noise_power scalar."""
    N, M, K = H_real.shape

    # One fused layout change instead of four separate transposes:
    #   stack -> [4, N, M, K] -> transpose -> [4, K, M, N] (batch on lanes).
    hv = jnp.stack([H_real, H_imag, V_real, V_imag], axis=0).astype(jnp.float32)
    hv = jnp.transpose(hv, (0, 3, 2, 1))  # [4, K, M, N]

    # Batch tile: lane-dense (multiple of 128), sized for a ~4 MiB input block.
    bytes_per_row = 4 * K * M * 4
    tn = max(128, min((4 << 20) // bytes_per_row, 4096))
    tn = (tn // 128) * 128
    tn = min(tn, _round_up(N, 128))

    num_tiles = pl.cdiv(N, tn)
    n_pad = num_tiles * tn
    if n_pad != N:
        hv = jnp.pad(hv, ((0, 0), (0, 0), (0, 0), (0, n_pad - N)))

    noise = jnp.reshape(jnp.asarray(noise_power, dtype=jnp.float32), (1,))

    in_block_bytes = 4 * K * M * tn * 4
    out_block_bytes = tn * 4
    vmem_limit = int(min(max(3 * (in_block_bytes + out_block_bytes) + (2 << 20),
                             16 << 20),
                         32 << 20))

    per_row = pl.pallas_call(
        _sum_rate_kernel,
        out_shape=jax.ShapeDtypeStruct((num_tiles, 1, tn), jnp.float32),
        grid_spec=pltpu.PrefetchScalarGridSpec(
            num_scalar_prefetch=1,
            grid=(num_tiles,),
            in_specs=[pl.BlockSpec((4, K, M, tn), lambda i, *_: (0, 0, 0, i))],
            out_specs=pl.BlockSpec((1, 1, tn), lambda i, *_: (i, 0, 0)),
        ),
        compiler_params=pltpu.CompilerParams(
            dimension_semantics=("parallel",),
            vmem_limit_bytes=vmem_limit,
        ),
    )(noise, hv)

    # Tiny final reduction in JAX; drop zero-padded batch rows before the mean.
    rates = per_row.reshape(-1)[:N]
    return -jnp.sum(rates) / N


def _reference_sum_rate_loss(H_real, H_imag, V_real, V_imag, noise_power):
    """Pure-JAX mirror of the PyTorch forward (for correctness checking)."""
    N, M, K = H_real.shape
    rate_cols = []
    for k1 in range(K):
        nom = None
        nom_denom = None
        for k2 in range(K):
            HrVr = jnp.einsum("NM,NM->N", H_real[:, :, k1], V_real[:, :, k2])
            HiVi = jnp.einsum("NM,NM->N", H_imag[:, :, k1], V_imag[:, :, k2])
            HrVi = jnp.einsum("NM,NM->N", H_real[:, :, k1], V_imag[:, :, k2])
            HiVr = jnp.einsum("NM,NM->N", H_imag[:, :, k1], V_real[:, :, k2])
            real_part = HrVr - HiVi
            imag_part = HrVi + HiVr
            norm2_hv = real_part**2 + imag_part**2
            if k1 == k2:
                nom = norm2_hv
            if k2 == 0:
                nom_denom = norm2_hv + noise_power
            else:
                nom_denom = nom_denom + norm2_hv
        denom = nom_denom - nom
        rate_cols.append(jnp.log2(1 + nom / denom))
    rate = jnp.stack(rate_cols, axis=1)  # [N, K]
    return -jnp.mean(jnp.sum(rate, axis=1))


if __name__ == "__main__":
    # Small, deterministic example consistent with the module: K users, M antennas.
    N, M, K = 8, 16, 4
    noise_power = 0.1

    key = jax.random.PRNGKey(0)
    k0, k1, k2, k3 = jax.random.split(key, 4)
    H_real = jax.random.normal(k0, (N, M, K), dtype=jnp.float32)
    H_imag = jax.random.normal(k1, (N, M, K), dtype=jnp.float32)
    V_real = jax.random.normal(k2, (N, M, K), dtype=jnp.float32)
    V_imag = jax.random.normal(k3, (N, M, K), dtype=jnp.float32)

    loss_fn = jax.jit(sum_rate_loss)
    loss = loss_fn(H_real, H_imag, V_real, V_imag, noise_power)
    loss = jax.block_until_ready(loss)

    ref = _reference_sum_rate_loss(H_real, H_imag, V_real, V_imag, noise_power)
    assert jnp.allclose(loss, ref, rtol=1e-5, atol=1e-5), (loss, ref)

    print("KERNEL_OK")
</pallas_src>

<mosaic_0001>
module attributes {stable_mosaic.version = 11 : i64} {
  func.func @_sum_rate_kernel(%arg0: i32, %arg1: memref<1xf32, #tpu.memory_space<smem>>, %arg2: memref<4x4x16x128xf32, #tpu.memory_space<vmem>>, %arg3: memref<1x1x128xf32, #tpu.memory_space<vmem>>) attributes {dimension_semantics = [#tpu.dimension_semantics<parallel>], iteration_bounds = array<i64: 1>, scalar_prefetch = 1 : i64, scratch_operands = 0 : i64, tpu.core_type = #tpu.core_type<tc>, window_params = [{transform_indices = @transform_0, window_bounds = array<i64: 4, 4, 16, 128>}, {transform_indices = @transform_1, window_bounds = array<i64: 1, 1, 128>}]} {
    %c0 = arith.constant 0 : index
    %0 = memref.load %arg1[%c0] : memref<1xf32, #tpu.memory_space<smem>>
    %c2 = arith.constant 2 : index
    %c0_0 = arith.constant 0 : index
    %c0_1 = arith.constant 0 : index
    %c0_2 = arith.constant 0 : index
    %1 = vector.load %arg2[%c2, %c0_0, %c0_1, %c0_2] : memref<4x4x16x128xf32, #tpu.memory_space<vmem>>, vector<1x1x16x128xf32>
    %2 = vector.shape_cast %1 : vector<1x1x16x128xf32> to vector<16x128xf32>
    %c2_3 = arith.constant 2 : index
    %c1 = arith.constant 1 : index
    %c0_4 = arith.constant 0 : index
    %c0_5 = arith.constant 0 : index
    %3 = vector.load %arg2[%c2_3, %c1, %c0_4, %c0_5] : memref<4x4x16x128xf32, #tpu.memory_space<vmem>>, vector<1x1x16x128xf32>
    %4 = vector.shape_cast %3 : vector<1x1x16x128xf32> to vector<16x128xf32>
    %c2_6 = arith.constant 2 : index
    %c2_7 = arith.constant 2 : index
    %c0_8 = arith.constant 0 : index
    %c0_9 = arith.constant 0 : index
    %5 = vector.load %arg2[%c2_6, %c2_7, %c0_8, %c0_9] : memref<4x4x16x128xf32, #tpu.memory_space<vmem>>, vector<1x1x16x128xf32>
    %6 = vector.shape_cast %5 : vector<1x1x16x128xf32> to vector<16x128xf32>
    %c2_10 = arith.constant 2 : index
    %c3 = arith.constant 3 : index
    %c0_11 = arith.constant 0 : index
    %c0_12 = arith.constant 0 : index
    %7 = vector.load %arg2[%c2_10, %c3, %c0_11, %c0_12] : memref<4x4x16x128xf32, #tpu.memory_space<vmem>>, vector<1x1x16x128xf32>
    %8 = vector.shape_cast %7 : vector<1x1x16x128xf32> to vector<16x128xf32>
    %c3_13 = arith.constant 3 : index
    %c0_14 = arith.constant 0 : index
    %c0_15 = arith.constant 0 : index
    %c0_16 = arith.constant 0 : index
    %9 = vector.load %arg2[%c3_13, %c0_14, %c0_15, %c0_16] : memref<4x4x16x128xf32, #tpu.memory_space<vmem>>, vector<1x1x16x128xf32>
    %10 = vector.shape_cast %9 : vector<1x1x16x128xf32> to vector<16x128xf32>
    %c3_17 = arith.constant 3 : index
    %c1_18 = arith.constant 1 : index
    %c0_19 = arith.constant 0 : index
    %c0_20 = arith.constant 0 : index
    %11 = vector.load %arg2[%c3_17, %c1_18, %c0_19, %c0_20] : memref<4x4x16x128xf32, #tpu.memory_space<vmem>>, vector<1x1x16x128xf32>
    %12 = vector.shape_cast %11 : vector<1x1x16x128xf32> to vector<16x128xf32>
    %c3_21 = arith.constant 3 : index
    %c2_22 = arith.constant 2 : index
    %c0_23 = arith.constant 0 : index
    %c0_24 = arith.constant 0 : index
    %13 = vector.load %arg2[%c3_21, %c2_22, %c0_23, %c0_24] : memref<4x4x16x128xf32, #tpu.memory_space<vmem>>, vector<1x1x16x128xf32>
    %14 = vector.shape_cast %13 : vector<1x1x16x128xf32> to vector<16x128xf32>
    %c3_25 = arith.constant 3 : index
    %c3_26 = arith.constant 3 : index
    %c0_27 = arith.constant 0 : index
    %c0_28 = arith.constant 0 : index
    %15 = vector.load %arg2[%c3_25, %c3_26, %c0_27, %c0_28] : memref<4x4x16x128xf32, #tpu.memory_space<vmem>>, vector<1x1x16x128xf32>
    %16 = vector.shape_cast %15 : vector<1x1x16x128xf32> to vector<16x128xf32>
    %cst = arith.constant 0.000000e+00 : f32
    %17 = vector.broadcast %cst : f32 to vector<1x128xf32>
    %c0_29 = arith.constant 0 : index
    %c0_30 = arith.constant 0 : index
    %c0_31 = arith.constant 0 : index
    %c0_32 = arith.constant 0 : index
    %18 = vector.load %arg2[%c0_29, %c0_30, %c0_31, %c0_32] : memref<4x4x16x128xf32, #tpu.memory_space<vmem>>, vector<1x1x16x128xf32>
    %19 = vector.shape_cast %18 : vector<1x1x16x128xf32> to vector<16x128xf32>
    %c1_33 = arith.constant 1 : index
    %c0_34 = arith.constant 0 : index
    %c0_35 = arith.constant 0 : index
    %c0_36 = arith.constant 0 : index
    %20 = vector.load %arg2[%c1_33, %c0_34, %c0_35, %c0_36] : memref<4x4x16x128xf32, #tpu.memory_space<vmem>>, vector<1x1x16x128xf32>
    %21 = vector.shape_cast %20 : vector<1x1x16x128xf32> to vector<16x128xf32>
    %22 = arith.mulf %19, %2 : vector<16x128xf32>
    %23 = arith.mulf %21, %10 : vector<16x128xf32>
    %24 = arith.subf %22, %23 : vector<16x128xf32>
    %cst_37 = arith.constant dense<0.000000e+00> : vector<128xf32>
    %25 = vector.multi_reduction <add>, %24, %cst_37 [0] : vector<16x128xf32> to vector<128xf32>
    %26 = vector.shape_cast %25 : vector<128xf32> to vector<1x128xf32>
    %27 = arith.mulf %19, %10 : vector<16x128xf32>
    %28 = arith.mulf %21, %2 : vector<16x128xf32>
    %29 = arith.addf %27, %28 : vector<16x128xf32>
    %cst_38 = arith.constant dense<0.000000e+00> : vector<128xf32>
    %30 = vector.multi_reduction <add>, %29, %cst_38 [0] : vector<16x128xf32> to vector<128xf32>
    %31 = vector.shape_cast %30 : vector<128xf32> to vector<1x128xf32>
    %32 = arith.mulf %26, %26 : vector<1x128xf32>
    %33 = arith.mulf %31, %31 : vector<1x128xf32>
    %34 = arith.addf %32, %33 : vector<1x128xf32>
    %35 = arith.mulf %19, %4 : vector<16x128xf32>
    %36 = arith.mulf %21, %12 : vector<16x128xf32>
    %37 = arith.subf %35, %36 : vector<16x128xf32>
    %cst_39 = arith.constant dense<0.000000e+00> : vector<128xf32>
    %38 = vector.multi_reduction <add>, %37, %cst_39 [0] : vector<16x128xf32> to vector<128xf32>
    %39 = vector.shape_cast %38 : vector<128xf32> to vector<1x128xf32>
    %40 = arith.mulf %19, %12 : vector<16x128xf32>
    %41 = arith.mulf %21, %4 : vector<16x128xf32>
    %42 = arith.addf %40, %41 : vector<16x128xf32>
    %cst_40 = arith.constant dense<0.000000e+00> : vector<128xf32>
    %43 = vector.multi_reduction <add>, %42, %cst_40 [0] : vector<16x128xf32> to vector<128xf32>
    %44 = vector.shape_cast %43 : vector<128xf32> to vector<1x128xf32>
    %45 = arith.mulf %39, %39 : vector<1x128xf32>
    %46 = arith.mulf %44, %44 : vector<1x128xf32>
    %47 = arith.addf %45, %46 : vector<1x128xf32>
    %48 = arith.addf %34, %47 : vector<1x128xf32>
    %49 = arith.mulf %19, %6 : vector<16x128xf32>
    %50 = arith.mulf %21, %14 : vector<16x128xf32>
    %51 = arith.subf %49, %50 : vector<16x128xf32>
    %cst_41 = arith.constant dense<0.000000e+00> : vector<128xf32>
    %52 = vector.multi_reduction <add>, %51, %cst_41 [0] : vector<16x128xf32> to vector<128xf32>
    %53 = vector.shape_cast %52 : vector<128xf32> to vector<1x128xf32>
    %54 = arith.mulf %19, %14 : vector<16x128xf32>
    %55 = arith.mulf %21, %6 : vector<16x128xf32>
    %56 = arith.addf %54, %55 : vector<16x128xf32>
    %cst_42 = arith.constant dense<0.000000e+00> : vector<128xf32>
    %57 = vector.multi_reduction <add>, %56, %cst_42 [0] : vector<16x128xf32> to vector<128xf32>
    %58 = vector.shape_cast %57 : vector<128xf32> to vector<1x128xf32>
    %59 = arith.mulf %53, %53 : vector<1x128xf32>
    %60 = arith.mulf %58, %58 : vector<1x128xf32>
    %61 = arith.addf %59, %60 : vector<1x128xf32>
    %62 = arith.addf %48, %61 : vector<1x128xf32>
    %63 = arith.mulf %19, %8 : vector<16x128xf32>
    %64 = arith.mulf %21, %16 : vector<16x128xf32>
    %65 = arith.subf %63, %64 : vector<16x128xf32>
    %cst_43 = arith.constant dense<0.000000e+00> : vector<128xf32>
    %66 = vector.multi_reduction <add>, %65, %cst_43 [0] : vector<16x128xf32> to vector<128xf32>
    %67 = vector.shape_cast %66 : vector<128xf32> to vector<1x128xf32>
    %68 = arith.mulf %19, %16 : vector<16x128xf32>
    %69 = arith.mulf %21, %8 : vector<16x128xf32>
    %70 = arith.addf %68, %69 : vector<16x128xf32>
    %cst_44 = arith.constant dense<0.000000e+00> : vector<128xf32>
    %71 = vector.multi_reduction <add>, %70, %cst_44 [0] : vector<16x128xf32> to vector<128xf32>
    %72 = vector.shape_cast %71 : vector<128xf32> to vector<1x128xf32>
    %73 = arith.mulf %67, %67 : vector<1x128xf32>
    %74 = arith.mulf %72, %72 : vector<1x128xf32>
    %75 = arith.addf %73, %74 : vector<1x128xf32>
    %76 = arith.addf %62, %75 : vector<1x128xf32>
    %77 = arith.subf %76, %34 : vector<1x128xf32>
    %78 = vector.broadcast %0 : f32 to vector<1x128xf32>
    %79 = arith.addf %77, %78 : vector<1x128xf32>
    %80 = arith.divf %34, %79 : vector<1x128xf32>
    %cst_45 = arith.constant 1.000000e+00 : f32
    %81 = vector.broadcast %cst_45 : f32 to vector<1x128xf32>
    %82 = arith.addf %81, %80 : vector<1x128xf32>
    %83 = math.log %82 : vector<1x128xf32>
    %cst_46 = arith.constant 2.000000e+00 : f32
    %84 = math.log %cst_46 : f32
    %85 = vector.broadcast %84 : f32 to vector<1x128xf32>
    %86 = arith.divf %83, %85 : vector<1x128xf32>
    %87 = arith.addf %17, %86 : vector<1x128xf32>
    %c0_47 = arith.constant 0 : index
    %c1_48 = arith.constant 1 : index
    %c0_49 = arith.constant 0 : index
    %c0_50 = arith.constant 0 : index
    %88 = vector.load %arg2[%c0_47, %c1_48, %c0_49, %c0_50] : memref<4x4x16x128xf32, #tpu.memory_space<vmem>>, vector<1x1x16x128xf32>
    %89 = vector.shape_cast %88 : vector<1x1x16x128xf32> to vector<16x128xf32>
    %c1_51 = arith.constant 1 : index
    %c1_52 = arith.constant 1 : index
    %c0_53 = arith.constant 0 : index
    %c0_54 = arith.constant 0 : index
    %90 = vector.load %arg2[%c1_51, %c1_52, %c0_53, %c0_54] : memref<4x4x16x128xf32, #tpu.memory_space<vmem>>, vector<1x1x16x128xf32>
    %91 = vector.shape_cast %90 : vector<1x1x16x128xf32> to vector<16x128xf32>
    %92 = arith.mulf %89, %2 : vector<16x128xf32>
    %93 = arith.mulf %91, %10 : vector<16x128xf32>
    %94 = arith.subf %92, %93 : vector<16x128xf32>
    %cst_55 = arith.constant dense<0.000000e+00> : vector<128xf32>
    %95 = vector.multi_reduction <add>, %94, %cst_55 [0] : vector<16x128xf32> to vector<128xf32>
    %96 = vector.shape_cast %95 : vector<128xf32> to vector<1x128xf32>
    %97 = arith.mulf %89, %10 : vector<16x128xf32>
    %98 = arith.mulf %91, %2 : vector<16x128xf32>
    %99 = arith.addf %97, %98 : vector<16x128xf32>
    %cst_56 = arith.constant dense<0.000000e+00> : vector<128xf32>
    %100 = vector.multi_reduction <add>, %99, %cst_56 [0] : vector<16x128xf32> to vector<128xf32>
    %101 = vector.shape_cast %100 : vector<128xf32> to vector<1x128xf32>
    %102 = arith.mulf %96, %96 : vector<1x128xf32>
    %103 = arith.mulf %101, %101 : vector<1x128xf32>
    %104 = arith.addf %102, %103 : vector<1x128xf32>
    %105 = arith.mulf %89, %4 : vector<16x128xf32>
    %106 = arith.mulf %91, %12 : vector<16x128xf32>
    %107 = arith.subf %105, %106 : vector<16x128xf32>
    %cst_57 = arith.constant dense<0.000000e+00> : vector<128xf32>
    %108 = vector.multi_reduction <add>, %107, %cst_57 [0] : vector<16x128xf32> to vector<128xf32>
    %109 = vector.shape_cast %108 : vector<128xf32> to vector<1x128xf32>
    %110 = arith.mulf %89, %12 : vector<16x128xf32>
    %111 = arith.mulf %91, %4 : vector<16x128xf32>
    %112 = arith.addf %110, %111 : vector<16x128xf32>
    %cst_58 = arith.constant dense<0.000000e+00> : vector<128xf32>
    %113 = vector.multi_reduction <add>, %112, %cst_58 [0] : vector<16x128xf32> to vector<128xf32>
    %114 = vector.shape_cast %113 : vector<128xf32> to vector<1x128xf32>
    %115 = arith.mulf %109, %109 : vector<1x128xf32>
    %116 = arith.mulf %114, %114 : vector<1x128xf32>
    %117 = arith.addf %115, %116 : vector<1x128xf32>
    %118 = arith.addf %104, %117 : vector<1x128xf32>
    %119 = arith.mulf %89, %6 : vector<16x128xf32>
    %120 = arith.mulf %91, %14 : vector<16x128xf32>
    %121 = arith.subf %119, %120 : vector<16x128xf32>
    %cst_59 = arith.constant dense<0.000000e+00> : vector<128xf32>
    %122 = vector.multi_reduction <add>, %121, %cst_59 [0] : vector<16x128xf32> to vector<128xf32>
    %123 = vector.shape_cast %122 : vector<128xf32> to vector<1x128xf32>
    %124 = arith.mulf %89, %14 : vector<16x128xf32>
    %125 = arith.mulf %91, %6 : vector<16x128xf32>
    %126 = arith.addf %124, %125 : vector<16x128xf32>
    %cst_60 = arith.constant dense<0.000000e+00> : vector<128xf32>
    %127 = vector.multi_reduction <add>, %126, %cst_60 [0] : vector<16x128xf32> to vector<128xf32>
    %128 = vector.shape_cast %127 : vector<128xf32> to vector<1x128xf32>
    %129 = arith.mulf %123, %123 : vector<1x128xf32>
    %130 = arith.mulf %128, %128 : vector<1x128xf32>
    %131 = arith.addf %129, %130 : vector<1x128xf32>
    %132 = arith.addf %118, %131 : vector<1x128xf32>
    %133 = arith.mulf %89, %8 : vector<16x128xf32>
    %134 = arith.mulf %91, %16 : vector<16x128xf32>
    %135 = arith.subf %133, %134 : vector<16x128xf32>
    %cst_61 = arith.constant dense<0.000000e+00> : vector<128xf32>
    %136 = vector.multi_reduction <add>, %135, %cst_61 [0] : vector<16x128xf32> to vector<128xf32>
    %137 = vector.shape_cast %136 : vector<128xf32> to vector<1x128xf32>
    %138 = arith.mulf %89, %16 : vector<16x128xf32>
    %139 = arith.mulf %91, %8 : vector<16x128xf32>
    %140 = arith.addf %138, %139 : vector<16x128xf32>
    %cst_62 = arith.constant dense<0.000000e+00> : vector<128xf32>
    %141 = vector.multi_reduction <add>, %140, %cst_62 [0] : vector<16x128xf32> to vector<128xf32>
    %142 = vector.shape_cast %141 : vector<128xf32> to vector<1x128xf32>
    %143 = arith.mulf %137, %137 : vector<1x128xf32>
    %144 = arith.mulf %142, %142 : vector<1x128xf32>
    %145 = arith.addf %143, %144 : vector<1x128xf32>
    %146 = arith.addf %132, %145 : vector<1x128xf32>
    %147 = arith.subf %146, %117 : vector<1x128xf32>
    %148 = vector.broadcast %0 : f32 to vector<1x128xf32>
    %149 = arith.addf %147, %148 : vector<1x128xf32>
    %150 = arith.divf %117, %149 : vector<1x128xf32>
    %cst_63 = arith.constant 1.000000e+00 : f32
    %151 = vector.broadcast %cst_63 : f32 to vector<1x128xf32>
    %152 = arith.addf %151, %150 : vector<1x128xf32>
    %153 = math.log %152 : vector<1x128xf32>
    %cst_64 = arith.constant 2.000000e+00 : f32
    %154 = math.log %cst_64 : f32
    %155 = vector.broadcast %154 : f32 to vector<1x128xf32>
    %156 = arith.divf %153, %155 : vector<1x128xf32>
    %157 = arith.addf %87, %156 : vector<1x128xf32>
    %c0_65 = arith.constant 0 : index
    %c2_66 = arith.constant 2 : index
    %c0_67 = arith.constant 0 : index
    %c0_68 = arith.constant 0 : index
    %158 = vector.load %arg2[%c0_65, %c2_66, %c0_67, %c0_68] : memref<4x4x16x128xf32, #tpu.memory_space<vmem>>, vector<1x1x16x128xf32>
    %159 = vector.shape_cast %158 : vector<1x1x16x128xf32> to vector<16x128xf32>
    %c1_69 = arith.constant 1 : index
    %c2_70 = arith.constant 2 : index
    %c0_71 = arith.constant 0 : index
    %c0_72 = arith.constant 0 : index
    %160 = vector.load %arg2[%c1_69, %c2_70, %c0_71, %c0_72] : memref<4x4x16x128xf32, #tpu.memory_space<vmem>>, vector<1x1x16x128xf32>
    %161 = vector.shape_cast %160 : vector<1x1x16x128xf32> to vector<16x128xf32>
    %162 = arith.mulf %159, %2 : vector<16x128xf32>
    %163 = arith.mulf %161, %10 : vector<16x128xf32>
    %164 = arith.subf %162, %163 : vector<16x128xf32>
    %cst_73 = arith.constant dense<0.000000e+00> : vector<128xf32>
    %165 = vector.multi_reduction <add>, %164, %cst_73 [0] : vector<16x128xf32> to vector<128xf32>
    %166 = vector.shape_cast %165 : vector<128xf32> to vector<1x128xf32>
    %167 = arith.mulf %159, %10 : vector<16x128xf32>
    %168 = arith.mulf %161, %2 : vector<16x128xf32>
    %169 = arith.addf %167, %168 : vector<16x128xf32>
    %cst_74 = arith.constant dense<0.000000e+00> : vector<128xf32>
    %170 = vector.multi_reduction <add>, %169, %cst_74 [0] : vector<16x128xf32> to vector<128xf32>
    %171 = vector.shape_cast %170 : vector<128xf32> to vector<1x128xf32>
    %172 = arith.mulf %166, %166 : vector<1x128xf32>
    %173 = arith.mulf %171, %171 : vector<1x128xf32>
    %174 = arith.addf %172, %173 : vector<1x128xf32>
    %175 = arith.mulf %159, %4 : vector<16x128xf32>
    %176 = arith.mulf %161, %12 : vector<16x128xf32>
    %177 = arith.subf %175, %176 : vector<16x128xf32>
    %cst_75 = arith.constant dense<0.000000e+00> : vector<128xf32>
    %178 = vector.multi_reduction <add>, %177, %cst_75 [0] : vector<16x128xf32> to vector<128xf32>
    %179 = vector.shape_cast %178 : vector<128xf32> to vector<1x128xf32>
    %180 = arith.mulf %159, %12 : vector<16x128xf32>
    %181 = arith.mulf %161, %4 : vector<16x128xf32>
    %182 = arith.addf %180, %181 : vector<16x128xf32>
    %cst_76 = arith.constant dense<0.000000e+00> : vector<128xf32>
    %183 = vector.multi_reduction <add>, %182, %cst_76 [0] : vector<16x128xf32> to vector<128xf32>
    %184 = vector.shape_cast %183 : vector<128xf32> to vector<1x128xf32>
    %185 = arith.mulf %179, %179 : vector<1x128xf32>
    %186 = arith.mulf %184, %184 : vector<1x128xf32>
    %187 = arith.addf %185, %186 : vector<1x128xf32>
    %188 = arith.addf %174, %187 : vector<1x128xf32>
    %189 = arith.mulf %159, %6 : vector<16x128xf32>
    %190 = arith.mulf %161, %14 : vector<16x128xf32>
    %191 = arith.subf %189, %190 : vector<16x128xf32>
    %cst_77 = arith.constant dense<0.000000e+00> : vector<128xf32>
    %192 = vector.multi_reduction <add>, %191, %cst_77 [0] : vector<16x128xf32> to vector<128xf32>
    %193 = vector.shape_cast %192 : vector<128xf32> to vector<1x128xf32>
    %194 = arith.mulf %159, %14 : vector<16x128xf32>
    %195 = arith.mulf %161, %6 : vector<16x128xf32>
    %196 = arith.addf %194, %195 : vector<16x128xf32>
    %cst_78 = arith.constant dense<0.000000e+00> : vector<128xf32>
    %197 = vector.multi_reduction <add>, %196, %cst_78 [0] : vector<16x128xf32> to vector<128xf32>
    %198 = vector.shape_cast %197 : vector<128xf32> to vector<1x128xf32>
    %199 = arith.mulf %193, %193 : vector<1x128xf32>
    %200 = arith.mulf %198, %198 : vector<1x128xf32>
    %201 = arith.addf %199, %200 : vector<1x128xf32>
    %202 = arith.addf %188, %201 : vector<1x128xf32>
    %203 = arith.mulf %159, %8 : vector<16x128xf32>
    %204 = arith.mulf %161, %16 : vector<16x128xf32>
    %205 = arith.subf %203, %204 : vector<16x128xf32>
    %cst_79 = arith.constant dense<0.000000e+00> : vector<128xf32>
    %206 = vector.multi_reduction <add>, %205, %cst_79 [0] : vector<16x128xf32> to vector<128xf32>
    %207 = vector.shape_cast %206 : vector<128xf32> to vector<1x128xf32>
    %208 = arith.mulf %159, %16 : vector<16x128xf32>
    %209 = arith.mulf %161, %8 : vector<16x128xf32>
    %210 = arith.addf %208, %209 : vector<16x128xf32>
    %cst_80 = arith.constant dense<0.000000e+00> : vector<128xf32>
    %211 = vector.multi_reduction <add>, %210, %cst_80 [0] : vector<16x128xf32> to vector<128xf32>
    %212 = vector.shape_cast %211 : vector<128xf32> to vector<1x128xf32>
    %213 = arith.mulf %207, %207 : vector<1x128xf32>
    %214 = arith.mulf %212, %212 : vector<1x128xf32>
    %215 = arith.addf %213, %214 : vector<1x128xf32>
    %216 = arith.addf %202, %215 : vector<1x128xf32>
    %217 = arith.subf %216, %201 : vector<1x128xf32>
    %218 = vector.broadcast %0 : f32 to vector<1x128xf32>
    %219 = arith.addf %217, %218 : vector<1x128xf32>
    %220 = arith.divf %201, %219 : vector<1x128xf32>
    %cst_81 = arith.constant 1.000000e+00 : f32
    %221 = vector.broadcast %cst_81 : f32 to vector<1x128xf32>
    %222 = arith.addf %221, %220 : vector<1x128xf32>
    %223 = math.log %222 : vector<1x128xf32>
    %cst_82 = arith.constant 2.000000e+00 : f32
    %224 = math.log %cst_82 : f32
    %225 = vector.broadcast %224 : f32 to vector<1x128xf32>
    %226 = arith.divf %223, %225 : vector<1x128xf32>
    %227 = arith.addf %157, %226 : vector<1x128xf32>
    %c0_83 = arith.constant 0 : index
    %c3_84 = arith.constant 3 : index
    %c0_85 = arith.constant 0 : index
    %c0_86 = arith.constant 0 : index
    %228 = vector.load %arg2[%c0_83, %c3_84, %c0_85, %c0_86] : memref<4x4x16x128xf32, #tpu.memory_space<vmem>>, vector<1x1x16x128xf32>
    %229 = vector.shape_cast %228 : vector<1x1x16x128xf32> to vector<16x128xf32>
    %c1_87 = arith.constant 1 : index
    %c3_88 = arith.constant 3 : index
    %c0_89 = arith.constant 0 : index
    %c0_90 = arith.constant 0 : index
    %230 = vector.load %arg2[%c1_87, %c3_88, %c0_89, %c0_90] : memref<4x4x16x128xf32, #tpu.memory_space<vmem>>, vector<1x1x16x128xf32>
    %231 = vector.shape_cast %230 : vector<1x1x16x128xf32> to vector<16x128xf32>
    %232 = arith.mulf %229, %2 : vector<16x128xf32>
    %233 = arith.mulf %231, %10 : vector<16x128xf32>
    %234 = arith.subf %232, %233 : vector<16x128xf32>
    %cst_91 = arith.constant dense<0.000000e+00> : vector<128xf32>
    %235 = vector.multi_reduction <add>, %234, %cst_91 [0] : vector<16x128xf32> to vector<128xf32>
    %236 = vector.shape_cast %235 : vector<128xf32> to vector<1x128xf32>
    %237 = arith.mulf %229, %10 : vector<16x128xf32>
    %238 = arith.mulf %231, %2 : vector<16x128xf32>
    %239 = arith.addf %237, %238 : vector<16x128xf32>
    %cst_92 = arith.constant dense<0.000000e+00> : vector<128xf32>
    %240 = vector.multi_reduction <add>, %239, %cst_92 [0] : vector<16x128xf32> to vector<128xf32>
    %241 = vector.shape_cast %240 : vector<128xf32> to vector<1x128xf32>
    %242 = arith.mulf %236, %236 : vector<1x128xf32>
    %243 = arith.mulf %241, %241 : vector<1x128xf32>
    %244 = arith.addf %242, %243 : vector<1x128xf32>
    %245 = arith.mulf %229, %4 : vector<16x128xf32>
    %246 = arith.mulf %231, %12 : vector<16x128xf32>
    %247 = arith.subf %245, %246 : vector<16x128xf32>
    %cst_93 = arith.constant dense<0.000000e+00> : vector<128xf32>
    %248 = vector.multi_reduction <add>, %247, %cst_93 [0] : vector<16x128xf32> to vector<128xf32>
    %249 = vector.shape_cast %248 : vector<128xf32> to vector<1x128xf32>
    %250 = arith.mulf %229, %12 : vector<16x128xf32>
    %251 = arith.mulf %231, %4 : vector<16x128xf32>
    %252 = arith.addf %250, %251 : vector<16x128xf32>
    %cst_94 = arith.constant dense<0.000000e+00> : vector<128xf32>
    %253 = vector.multi_reduction <add>, %252, %cst_94 [0] : vector<16x128xf32> to vector<128xf32>
    %254 = vector.shape_cast %253 : vector<128xf32> to vector<1x128xf32>
    %255 = arith.mulf %249, %249 : vector<1x128xf32>
    %256 = arith.mulf %254, %254 : vector<1x128xf32>
    %257 = arith.addf %255, %256 : vector<1x128xf32>
    %258 = arith.addf %244, %257 : vector<1x128xf32>
    %259 = arith.mulf %229, %6 : vector<16x128xf32>
    %260 = arith.mulf %231, %14 : vector<16x128xf32>
    %261 = arith.subf %259, %260 : vector<16x128xf32>
    %cst_95 = arith.constant dense<0.000000e+00> : vector<128xf32>
    %262 = vector.multi_reduction <add>, %261, %cst_95 [0] : vector<16x128xf32> to vector<128xf32>
    %263 = vector.shape_cast %262 : vector<128xf32> to vector<1x128xf32>
    %264 = arith.mulf %229, %14 : vector<16x128xf32>
    %265 = arith.mulf %231, %6 : vector<16x128xf32>
    %266 = arith.addf %264, %265 : vector<16x128xf32>
    %cst_96 = arith.constant dense<0.000000e+00> : vector<128xf32>
    %267 = vector.multi_reduction <add>, %266, %cst_96 [0] : vector<16x128xf32> to vector<128xf32>
    %268 = vector.shape_cast %267 : vector<128xf32> to vector<1x128xf32>
    %269 = arith.mulf %263, %263 : vector<1x128xf32>
    %270 = arith.mulf %268, %268 : vector<1x128xf32>
    %271 = arith.addf %269, %270 : vector<1x128xf32>
    %272 = arith.addf %258, %271 : vector<1x128xf32>
    %273 = arith.mulf %229, %8 : vector<16x128xf32>
    %274 = arith.mulf %231, %16 : vector<16x128xf32>
    %275 = arith.subf %273, %274 : vector<16x128xf32>
    %cst_97 = arith.constant dense<0.000000e+00> : vector<128xf32>
    %276 = vector.multi_reduction <add>, %275, %cst_97 [0] : vector<16x128xf32> to vector<128xf32>
    %277 = vector.shape_cast %276 : vector<128xf32> to vector<1x128xf32>
    %278 = arith.mulf %229, %16 : vector<16x128xf32>
    %279 = arith.mulf %231, %8 : vector<16x128xf32>
    %280 = arith.addf %278, %279 : vector<16x128xf32>
    %cst_98 = arith.constant dense<0.000000e+00> : vector<128xf32>
    %281 = vector.multi_reduction <add>, %280, %cst_98 [0] : vector<16x128xf32> to vector<128xf32>
    %282 = vector.shape_cast %281 : vector<128xf32> to vector<1x128xf32>
    %283 = arith.mulf %277, %277 : vector<1x128xf32>
    %284 = arith.mulf %282, %282 : vector<1x128xf32>
    %285 = arith.addf %283, %284 : vector<1x128xf32>
    %286 = arith.addf %272, %285 : vector<1x128xf32>
    %287 = arith.subf %286, %285 : vector<1x128xf32>
    %288 = vector.broadcast %0 : f32 to vector<1x128xf32>
    %289 = arith.addf %287, %288 : vector<1x128xf32>
    %290 = arith.divf %285, %289 : vector<1x128xf32>
    %cst_99 = arith.constant 1.000000e+00 : f32
    %291 = vector.broadcast %cst_99 : f32 to vector<1x128xf32>
    %292 = arith.addf %291, %290 : vector<1x128xf32>
    %293 = math.log %292 : vector<1x128xf32>
    %cst_100 = arith.constant 2.000000e+00 : f32
    %294 = math.log %cst_100 : f32
    %295 = vector.broadcast %294 : f32 to vector<1x128xf32>
    %296 = arith.divf %293, %295 : vector<1x128xf32>
    %297 = arith.addf %227, %296 : vector<1x128xf32>
    %c0_101 = arith.constant 0 : index
    %c0_102 = arith.constant 0 : index
    %c0_103 = arith.constant 0 : index
    %298 = vector.load %arg3[%c0_101, %c0_102, %c0_103] : memref<1x1x128xf32, #tpu.memory_space<vmem>>, vector<1x1x128xf32>
    %299 = vector.shape_cast %298 : vector<1x1x128xf32> to vector<1x128xf32>
    %300 = vector.shape_cast %297 : vector<1x128xf32> to vector<1x1x128xf32>
    tpu.vector_store %arg3[%c0_101, %c0_102, %c0_103], %300 {strides = array<i32>} : memref<1x1x128xf32, #tpu.memory_space<vmem>>, vector<1x1x128xf32>,
    return
  }
  func.func @transform_0(%arg0: i32, %arg1: memref<1xf32, #tpu.memory_space<smem>>) -> (i32, i32, i32, i32) {
    %c0_i32 = arith.constant 0 : i32
    %c0_i32_0 = arith.constant 0 : i32
    %c0_i32_1 = arith.constant 0 : i32
    %c0_i32_2 = arith.constant 0 : i32
    return %c0_i32, %c0_i32_0, %c0_i32_1, %arg0 : i32, i32, i32, i32
  }
  func.func @transform_1(%arg0: i32, %arg1: memref<1xf32, #tpu.memory_space<smem>>) -> (i32, i32, i32) {
    %c0_i32 = arith.constant 0 : i32
    %c0_i32_0 = arith.constant 0 : i32
    %c0_i32_1 = arith.constant 0 : i32
    return %arg0, %c0_i32, %c0_i32_0 : i32, i32, i32
  }
}

</mosaic_0001>

<llo_original>
// kernel: sum_rate_loss.1
$region0: #{sum_rate_loss.1}
  #allocation0 [shape = 'u32[]', space=smem, size = 0x4, offset = 0x4, fixed_abs, tag = 'smem constant byte address 0x4 - core index']
  #allocation1 [shape = 'u32[144,128]{1,0:T(1,128)}', space=vmem, size = 0x12000, scoped, tag = 'internal scratch']
  #allocation2 [shape = 's32[1]{0}', space=sflag, size = 0x4, scoped, tag = 'scoped memory for sum_rate_loss.1']
  #allocation3 [shape = 'f32[1]{0:T(128)S(6)}', space=smem, size = 0x200, scoped, tag = 'prefetched SMEM operand 0']
  %s0 = inlined_call_operand.<no memory space> [shape: f32[1], index: 0, kind: input, shape index: {}]
  %s1 = inlined_call_operand.vmem [shape: f32[4,4,16,128], index: 1, kind: input, shape index: {}]
  %s2 = inlined_call_operand.vmem [shape: f32[1,1,128], index: 2, kind: output, shape index: {}]
  %s3 = sld [smem:[#allocation0]]
  $region14: #{sum_rate_loss.1} parent=0
    _
  %s5 = ssub.s32 1, %s3
  %s6 = scalar_select 0, %s5, %s3
  %7 = sst [smem:[#allocation3]] %s0
  // Predicated region
  $region2: #{sum_rate_loss.1} parent=0 // pred_check
    _
  $region3: #{sum_rate_loss.1} parent=0 // pred_check_branch
    %9 = sbr.rel (0) target = $region5
  $region4: #{sum_rate_loss.1} parent=0 // pred_region
    _
  $region5: #{sum_rate_loss.1} parent=0 // pred_fallthru
    _
  %s10 = sld [smem:[#allocation3]]
  %s11 = scalar_lea.vmem %s1, 128
  %v12 = vld [vmem:[%s11] sm:$0xff]
  %v13 = vld [vmem:[%s11 + $0x8] sm:$0xff]
  %s14 = scalar_lea.vmem %s1, 144
  %v15 = vld [vmem:[%s14] sm:$0xff]
  %v16 = vld [vmem:[%s14 + $0x8] sm:$0xff]
  %s17 = scalar_lea.vmem %s1, 160
  %v18 = vld [vmem:[%s17] sm:$0xff]
  %v19 = vld [vmem:[%s17 + $0x8] sm:$0xff]
  %s20 = scalar_lea.vmem %s1, 176
  %v21 = vld [vmem:[%s20] sm:$0xff]
  %v22 = vld [vmem:[%s20 + $0x8] sm:$0xff]
  %s23 = scalar_lea.vmem %s1, 192
  %v24 = vld [vmem:[%s23] sm:$0xff]
  %v25 = vld [vmem:[%s23 + $0x8] sm:$0xff]
  %s26 = scalar_lea.vmem %s1, 208
  %v27 = vld [vmem:[%s26] sm:$0xff]
  %v28 = vld [vmem:[%s26 + $0x8] sm:$0xff]
  %s29 = scalar_lea.vmem %s1, 224
  %v30 = vld [vmem:[%s29] sm:$0xff]
  %v31 = vld [vmem:[%s29 + $0x8] sm:$0xff]
  %s32 = scalar_lea.vmem %s1, 240
  %v33 = vld [vmem:[%s32] sm:$0xff]
  %v34 = vld [vmem:[%s32 + $0x8] sm:$0xff]
  %v35 = vld [vmem:[%s1] sm:$0xff]
  %v36 = vld [vmem:[%s1 + $0x8] sm:$0xff]
  %s37 = scalar_lea.vmem %s1, 64
  %v38 = vld [vmem:[%s37] sm:$0xff]
  %v39 = vld [vmem:[%s37 + $0x8] sm:$0xff]
  %v40 = vmul.f32 %v35, %v12
  %v41 = vmul.f32 %v36, %v13
  %v42 = vmul.f32 %v38, %v24
  %v43 = vmul.f32 %v39, %v25
  %v44 = vsub.f32 %v40, %v42
  %v45 = vsub.f32 %v41, %v43
  %v46 = vadd.f32 %v44, %v45
  %v47 = vrot.slane %v46, 4
  %v48 = vadd.f32 %v46, %v47
  %v49 = vrot.slane %v48, 2
  %v50 = vadd.f32 %v48, %v49
  %v51 = vrot.slane %v50, 1
  %v52 = vadd.f32 %v50, %v51
  %v53 = vmul.f32 %v35, %v24
  %v54 = vmul.f32 %v36, %v25
  %v55 = vmul.f32 %v38, %v12
  %v56 = vmul.f32 %v39, %v13
  %v57 = vadd.f32 %v53, %v55
  %v58 = vadd.f32 %v54, %v56
  %v59 = vadd.f32 %v57, %v58
  %v60 = vrot.slane %v59, 4
  %v61 = vadd.f32 %v59, %v60
  %v62 = vrot.slane %v61, 2
  %v63 = vadd.f32 %v61, %v62
  %v64 = vrot.slane %v63, 1
  %v65 = vadd.f32 %v63, %v64
  %v66 = vmul.f32 %v52, %v52
  %v67 = vmul.f32 %v65, %v65
  %v68 = vadd.f32 %v66, %v67
  %v69 = vmul.f32 %v35, %v15
  %v70 = vmul.f32 %v36, %v16
  %v71 = vmul.f32 %v38, %v27
  %v72 = vmul.f32 %v39, %v28
  %v73 = vsub.f32 %v69, %v71
  %v74 = vsub.f32 %v70, %v72
  %v75 = vadd.f32 %v73, %v74
  %v76 = vrot.slane %v75, 4
  %v77 = vadd.f32 %v75, %v76
  %v78 = vrot.slane %v77, 2
  %v79 = vadd.f32 %v77, %v78
  %v80 = vrot.slane %v79, 1
  %v81 = vadd.f32 %v79, %v80
  %v82 = vmul.f32 %v35, %v27
  %v83 = vmul.f32 %v36, %v28
  %v84 = vmul.f32 %v38, %v15
  %v85 = vmul.f32 %v39, %v16
  %v86 = vadd.f32 %v82, %v84
  %v87 = vadd.f32 %v83, %v85
  %v88 = vadd.f32 %v86, %v87
  %v89 = vrot.slane %v88, 4
  %v90 = vadd.f32 %v88, %v89
  %v91 = vrot.slane %v90, 2
  %v92 = vadd.f32 %v90, %v91
  %v93 = vrot.slane %v92, 1
  %v94 = vadd.f32 %v92, %v93
  %v95 = vmul.f32 %v81, %v81
  %v96 = vmul.f32 %v94, %v94
  %v97 = vadd.f32 %v95, %v96
  %v98 = vadd.f32 %v68, %v97
  %v99 = vmul.f32 %v35, %v18
  %v100 = vmul.f32 %v36, %v19
  %v101 = vmul.f32 %v38, %v30
  %v102 = vmul.f32 %v39, %v31
  %v103 = vsub.f32 %v99, %v101
  %v104 = vsub.f32 %v100, %v102
  %v105 = vadd.f32 %v103, %v104
  %v106 = vrot.slane %v105, 4
  %v107 = vadd.f32 %v105, %v106
  %v108 = vrot.slane %v107, 2
  %v109 = vadd.f32 %v107, %v108
  %v110 = vrot.slane %v109, 1
  %v111 = vadd.f32 %v109, %v110
  %v112 = vmul.f32 %v35, %v30
  %v113 = vmul.f32 %v36, %v31
  %v114 = vmul.f32 %v38, %v18
  %v115 = vmul.f32 %v39, %v19
  %v116 = vadd.f32 %v112, %v114
  %v117 = vadd.f32 %v113, %v115
  %v118 = vadd.f32 %v116, %v117
  %v119 = vrot.slane %v118, 4
  %v120 = vadd.f32 %v118, %v119
  %v121 = vrot.slane %v120, 2
  %v122 = vadd.f32 %v120, %v121
  %v123 = vrot.slane %v122, 1
  %v124 = vadd.f32 %v122, %v123
  %v125 = vmul.f32 %v111, %v111
  %v126 = vmul.f32 %v124, %v124
  %v127 = vadd.f32 %v125, %v126
  %v128 = vadd.f32 %v98, %v127
  %v129 = vmul.f32 %v35, %v21
  %v130 = vmul.f32 %v36, %v22
  %v131 = vmul.f32 %v38, %v33
  %v132 = vmul.f32 %v39, %v34
  %v133 = vsub.f32 %v129, %v131
  %v134 = vsub.f32 %v130, %v132
  %v135 = vadd.f32 %v133, %v134
  %v136 = vrot.slane %v135, 4
  %v137 = vadd.f32 %v135, %v136
  %v138 = vrot.slane %v137, 2
  %v139 = vadd.f32 %v137, %v138
  %v140 = vrot.slane %v139, 1
  %v141 = vadd.f32 %v139, %v140
  %v142 = vmul.f32 %v35, %v33
  %v143 = vmul.f32 %v36, %v34
  %v144 = vmul.f32 %v38, %v21
  %v145 = vmul.f32 %v39, %v22
  %v146 = vadd.f32 %v142, %v144
  %v147 = vadd.f32 %v143, %v145
  %v148 = vadd.f32 %v146, %v147
  %v149 = vrot.slane %v148, 4
  %v150 = vadd.f32 %v148, %v149
  %v151 = vrot.slane %v150, 2
  %v152 = vadd.f32 %v150, %v151
  %v153 = vrot.slane %v152, 1
  %v154 = vadd.f32 %v152, %v153
  %v155 = vmul.f32 %v141, %v141
  %v156 = vmul.f32 %v154, %v154
  %v157 = vadd.f32 %v155, %v156
  %v158 = vadd.f32 %v128, %v157
  %v159 = vsub.f32 %v158, %v68
  %v160 = vstv %s10
  %v161 = vadd.f32 %v159, %v160
  %v162 = vrcp.pop %v161
  %v163 = vmul.f32 %v68, %v162
  %v164 = vadd.f32 %v163, 1.0
  %v165 = vlog2.pop %v164
  %v166 = vmul.f32 %v165, 0.6931472
  %v167 = vrcp.pop 0.6931472
  %v168 = vmul.f32 %v166, %v167
  %v169 = vadd.f32 %v168, 0.0
  %s170 = scalar_lea.vmem %s1, 16
  %v171 = vld [vmem:[%s170] sm:$0xff]
  %v172 = vld [vmem:[%s170 + $0x8] sm:$0xff]
  %s173 = scalar_lea.vmem %s1, 80
  %v174 = vld [vmem:[%s173] sm:$0xff]
  %v175 = vld [vmem:[%s173 + $0x8] sm:$0xff]
  %v176 = vmul.f32 %v171, %v12
  %v177 = vmul.f32 %v172, %v13
  %v178 = vmul.f32 %v174, %v24
  %v179 = vmul.f32 %v175, %v25
  %v180 = vsub.f32 %v176, %v178
  %v181 = vsub.f32 %v177, %v179
  %v182 = vadd.f32 %v180, %v181
  %v183 = vrot.slane %v182, 4
  %v184 = vadd.f32 %v182, %v183
  %v185 = vrot.slane %v184, 2
  %v186 = vadd.f32 %v184, %v185
  %v187 = vrot.slane %v186, 1
  %v188 = vadd.f32 %v186, %v187
  %v189 = vmul.f32 %v171, %v24
  %v190 = vmul.f32 %v172, %v25
  %v191 = vmul.f32 %v174, %v12
  %v192 = vmul.f32 %v175, %v13
  %v193 = vadd.f32 %v189, %v191
  %v194 = vadd.f32 %v190, %v192
  %v195 = vadd.f32 %v193, %v194
  %v196 = vrot.slane %v195, 4
  %v197 = vadd.f32 %v195, %v196
  %v198 = vrot.slane %v197, 2
  %v199 = vadd.f32 %v197, %v198
  %v200 = vrot.slane %v199, 1
  %v201 = vadd.f32 %v199, %v200
  %v202 = vmul.f32 %v188, %v188
  %v203 = vmul.f32 %v201, %v201
  %v204 = vadd.f32 %v202, %v203
  %v205 = vmul.f32 %v171, %v15
  %v206 = vmul.f32 %v172, %v16
  %v207 = vmul.f32 %v174, %v27
  %v208 = vmul.f32 %v175, %v28
  %v209 = vsub.f32 %v205, %v207
  %v210 = vsub.f32 %v206, %v208
  %v211 = vadd.f32 %v209, %v210
  %v212 = vrot.slane %v211, 4
  %v213 = vadd.f32 %v211, %v212
  %v214 = vrot.slane %v213, 2
  %v215 = vadd.f32 %v213, %v214
  %v216 = vrot.slane %v215, 1
  %v217 = vadd.f32 %v215, %v216
  %v218 = vmul.f32 %v171, %v27
  %v219 = vmul.f32 %v172, %v28
  %v220 = vmul.f32 %v174, %v15
  %v221 = vmul.f32 %v175, %v16
  %v222 = vadd.f32 %v218, %v220
  %v223 = vadd.f32 %v219, %v221
  %v224 = vadd.f32 %v222, %v223
  %v225 = vrot.slane %v224, 4
  %v226 = vadd.f32 %v224, %v225
  %v227 = vrot.slane %v226, 2
  %v228 = vadd.f32 %v226, %v227
  %v229 = vrot.slane %v228, 1
  %v230 = vadd.f32 %v228, %v229
  %v231 = vmul.f32 %v217, %v217
  %v232 = vmul.f32 %v230, %v230
  %v233 = vadd.f32 %v231, %v232
  %v234 = vadd.f32 %v204, %v233
  %v235 = vmul.f32 %v171, %v18
  %v236 = vmul.f32 %v172, %v19
  %v237 = vmul.f32 %v174, %v30
  %v238 = vmul.f32 %v175, %v31
  %v239 = vsub.f32 %v235, %v237
  %v240 = vsub.f32 %v236, %v238
  %v241 = vadd.f32 %v239, %v240
  %v242 = vrot.slane %v241, 4
  %v243 = vadd.f32 %v241, %v242
  %v244 = vrot.slane %v243, 2
  %v245 = vadd.f32 %v243, %v244
  %v246 = vrot.slane %v245, 1
  %v247 = vadd.f32 %v245, %v246
  %v248 = vmul.f32 %v171, %v30
  %v249 = vmul.f32 %v172, %v31
  %v250 = vmul.f32 %v174, %v18
  %v251 = vmul.f32 %v175, %v19
  %v252 = vadd.f32 %v248, %v250
  %v253 = vadd.f32 %v249, %v251
  %v254 = vadd.f32 %v252, %v253
  %v255 = vrot.slane %v254, 4
  %v256 = vadd.f32 %v254, %v255
  %v257 = vrot.slane %v256, 2
  %v258 = vadd.f32 %v256, %v257
  %v259 = vrot.slane %v258, 1
  %v260 = vadd.f32 %v258, %v259
  %v261 = vmul.f32 %v247, %v247
  %v262 = vmul.f32 %v260, %v260
  %v263 = vadd.f32 %v261, %v262
  %v264 = vadd.f32 %v234, %v263
  %v265 = vmul.f32 %v171, %v21
  %v266 = vmul.f32 %v172, %v22
  %v267 = vmul.f32 %v174, %v33
  %v268 = vmul.f32 %v175, %v34
  %v269 = vsub.f32 %v265, %v267
  %v270 = vsub.f32 %v266, %v268
  %v271 = vadd.f32 %v269, %v270
  %v272 = vrot.slane %v271, 4
  %v273 = vadd.f32 %v271, %v272
  %v274 = vrot.slane %v273, 2
  %v275 = vadd.f32 %v273, %v274
  %v276 = vrot.slane %v275, 1
  %v277 = vadd.f32 %v275, %v276
  %v278 = vmul.f32 %v171, %v33
  %v279 = vmul.f32 %v172, %v34
  %v280 = vmul.f32 %v174, %v21
  %v281 = vmul.f32 %v175, %v22
  %v282 = vadd.f32 %v278, %v280
  %v283 = vadd.f32 %v279, %v281
  %v284 = vadd.f32 %v282, %v283
  %v285 = vrot.slane %v284, 4
  %v286 = vadd.f32 %v284, %v285
  %v287 = vrot.slane %v286, 2
  %v288 = vadd.f32 %v286, %v287
  %v289 = vrot.slane %v288, 1
  %v290 = vadd.f32 %v288, %v289
  %v291 = vmul.f32 %v277, %v277
  %v292 = vmul.f32 %v290, %v290
  %v293 = vadd.f32 %v291, %v292
  %v294 = vadd.f32 %v264, %v293
  %v295 = vsub.f32 %v294, %v233
  %v296 = vadd.f32 %v295, %v160
  %v297 = vrcp.pop %v296
  %v298 = vmul.f32 %v233, %v297
  %v299 = vadd.f32 %v298, 1.0
  %v300 = vlog2.pop %v299
  %v301 = vmul.f32 %v300, 0.6931472
  %v302 = vmul.f32 %v301, %v167
  %v303 = vadd.f32 %v169, %v302
  %s304 = scalar_lea.vmem %s1, 32
  %v305 = vld [vmem:[%s304] sm:$0xff]
  %v306 = vld [vmem:[%s304 + $0x8] sm:$0xff]
  %s307 = scalar_lea.vmem %s1, 96
  %v308 = vld [vmem:[%s307] sm:$0xff]
  %v309 = vld [vmem:[%s307 + $0x8] sm:$0xff]
  %v310 = vmul.f32 %v305, %v12
  %v311 = vmul.f32 %v306, %v13
  %v312 = vmul.f32 %v308, %v24
  %v313 = vmul.f32 %v309, %v25
  %v314 = vsub.f32 %v310, %v312
  %v315 = vsub.f32 %v311, %v313
  %v316 = vadd.f32 %v314, %v315
  %v317 = vrot.slane %v316, 4
  %v318 = vadd.f32 %v316, %v317
  %v319 = vrot.slane %v318, 2
  %v320 = vadd.f32 %v318, %v319
  %v321 = vrot.slane %v320, 1
  %v322 = vadd.f32 %v320, %v321
  %v323 = vmul.f32 %v305, %v24
  %v324 = vmul.f32 %v306, %v25
  %v325 = vmul.f32 %v308, %v12
  %v326 = vmul.f32 %v309, %v13
  %v327 = vadd.f32 %v323, %v325
  %v328 = vadd.f32 %v324, %v326
  %v329 = vadd.f32 %v327, %v328
  %v330 = vrot.slane %v329, 4
  %v331 = vadd.f32 %v329, %v330
  %v332 = vrot.slane %v331, 2
  %v333 = vadd.f32 %v331, %v332
  %v334 = vrot.slane %v333, 1
  %v335 = vadd.f32 %v333, %v334
  %v336 = vmul.f32 %v322, %v322
  %v337 = vmul.f32 %v335, %v335
  %v338 = vadd.f32 %v336, %v337
  %v339 = vmul.f32 %v305, %v15
  %v340 = vmul.f32 %v306, %v16
  %v341 = vmul.f32 %v308, %v27
  %v342 = vmul.f32 %v309, %v28
  %v343 = vsub.f32 %v339, %v341
  %v344 = vsub.f32 %v340, %v342
  %v345 = vadd.f32 %v343, %v344
  %v346 = vrot.slane %v345, 4
  %v347 = vadd.f32 %v345, %v346
  %v348 = vrot.slane %v347, 2
  %v349 = vadd.f32 %v347, %v348
  %v350 = vrot.slane %v349, 1
  %v351 = vadd.f32 %v349, %v350
  %v352 = vmul.f32 %v305, %v27
  %v353 = vmul.f32 %v306, %v28
  %v354 = vmul.f32 %v308, %v15
  %v355 = vmul.f32 %v309, %v16
  %v356 = vadd.f32 %v352, %v354
  %v357 = vadd.f32 %v353, %v355
  %v358 = vadd.f32 %v356, %v357
  %v359 = vrot.slane %v358, 4
  %v360 = vadd.f32 %v358, %v359
  %v361 = vrot.slane %v360, 2
  %v362 = vadd.f32 %v360, %v361
  %v363 = vrot.slane %v362, 1
  %v364 = vadd.f32 %v362, %v363
  %v365 = vmul.f32 %v351, %v351
  %v366 = vmul.f32 %v364, %v364
  %v367 = vadd.f32 %v365, %v366
  %v368 = vadd.f32 %v338, %v367
  %v369 = vmul.f32 %v305, %v18
  %v370 = vmul.f32 %v306, %v19
  %v371 = vmul.f32 %v308, %v30
  %v372 = vmul.f32 %v309, %v31
  %v373 = vsub.f32 %v369, %v371
  %v374 = vsub.f32 %v370, %v372
  %v375 = vadd.f32 %v373, %v374
  %v376 = vrot.slane %v375, 4
  %v377 = vadd.f32 %v375, %v376
  %v378 = vrot.slane %v377, 2
  %v379 = vadd.f32 %v377, %v378
  %v380 = vrot.slane %v379, 1
  %v381 = vadd.f32 %v379, %v380
  %v382 = vmul.f32 %v305, %v30
  %v383 = vmul.f32 %v306, %v31
  %v384 = vmul.f32 %v308, %v18
  %v385 = vmul.f32 %v309, %v19
  %v386 = vadd.f32 %v382, %v384
  %v387 = vadd.f32 %v383, %v385
  %v388 = vadd.f32 %v386, %v387
  %v389 = vrot.slane %v388, 4
  %v390 = vadd.f32 %v388, %v389
  %v391 = vrot.slane %v390, 2
  %v392 = vadd.f32 %v390, %v391
  %v393 = vrot.slane %v392, 1
  %v394 = vadd.f32 %v392, %v393
  %v395 = vmul.f32 %v381, %v381
  %v396 = vmul.f32 %v394, %v394
  %v397 = vadd.f32 %v395, %v396
  %v398 = vadd.f32 %v368, %v397
  %v399 = vmul.f32 %v305, %v21
  %v400 = vmul.f32 %v306, %v22
  %v401 = vmul.f32 %v308, %v33
  %v402 = vmul.f32 %v309, %v34
  %v403 = vsub.f32 %v399, %v401
  %v404 = vsub.f32 %v400, %v402
  %v405 = vadd.f32 %v403, %v404
  %v406 = vrot.slane %v405, 4
  %v407 = vadd.f32 %v405, %v406
  %v408 = vrot.slane %v407, 2
  %v409 = vadd.f32 %v407, %v408
  %v410 = vrot.slane %v409, 1
  %v411 = vadd.f32 %v409, %v410
  %v412 = vmul.f32 %v305, %v33
  %v413 = vmul.f32 %v306, %v34
  %v414 = vmul.f32 %v308, %v21
  %v415 = vmul.f32 %v309, %v22
  %v416 = vadd.f32 %v412, %v414
  %v417 = vadd.f32 %v413, %v415
  %v418 = vadd.f32 %v416, %v417
  %v419 = vrot.slane %v418, 4
  %v420 = vadd.f32 %v418, %v419
  %v421 = vrot.slane %v420, 2
  %v422 = vadd.f32 %v420, %v421
  %v423 = vrot.slane %v422, 1
  %v424 = vadd.f32 %v422, %v423
  %v425 = vmul.f32 %v411, %v411
  %v426 = vmul.f32 %v424, %v424
  %v427 = vadd.f32 %v425, %v426
  %v428 = vadd.f32 %v398, %v427
  %v429 = vsub.f32 %v428, %v397
  %v430 = vadd.f32 %v429, %v160
  %v431 = vrcp.pop %v430
  %v432 = vmul.f32 %v397, %v431
  %v433 = vadd.f32 %v432, 1.0
  %v434 = vlog2.pop %v433
  %v435 = vmul.f32 %v434, 0.6931472
  %v436 = vmul.f32 %v435, %v167
  %v437 = vadd.f32 %v303, %v436
  %s438 = scalar_lea.vmem %s1, 48
  %v439 = vld [vmem:[%s438] sm:$0xff]
  %v440 = vld [vmem:[%s438 + $0x8] sm:$0xff]
  %s441 = scalar_lea.vmem %s1, 112
  %v442 = vld [vmem:[%s441] sm:$0xff]
  %v443 = vld [vmem:[%s441 + $0x8] sm:$0xff]
  %v444 = vmul.f32 %v439, %v12
  %v445 = vmul.f32 %v440, %v13
  %v446 = vmul.f32 %v442, %v24
  %v447 = vmul.f32 %v443, %v25
  %v448 = vsub.f32 %v444, %v446
  %v449 = vsub.f32 %v445, %v447
  %v450 = vadd.f32 %v448, %v449
  %v451 = vrot.slane %v450, 4
  %v452 = vadd.f32 %v450, %v451
  %v453 = vrot.slane %v452, 2
  %v454 = vadd.f32 %v452, %v453
  %v455 = vrot.slane %v454, 1
  %v456 = vadd.f32 %v454, %v455
  %v457 = vmul.f32 %v439, %v24
  %v458 = vmul.f32 %v440, %v25
  %v459 = vmul.f32 %v442, %v12
  %v460 = vmul.f32 %v443, %v13
  %v461 = vadd.f32 %v457, %v459
  %v462 = vadd.f32 %v458, %v460
  %v463 = vadd.f32 %v461, %v462
  %v464 = vrot.slane %v463, 4
  %v465 = vadd.f32 %v463, %v464
  %v466 = vrot.slane %v465, 2
  %v467 = vadd.f32 %v465, %v466
  %v468 = vrot.slane %v467, 1
  %v469 = vadd.f32 %v467, %v468
  %v470 = vmul.f32 %v456, %v456
  %v471 = vmul.f32 %v469, %v469
  %v472 = vadd.f32 %v470, %v471
  %v473 = vmul.f32 %v439, %v15
  %v474 = vmul.f32 %v440, %v16
  %v475 = vmul.f32 %v442, %v27
  %v476 = vmul.f32 %v443, %v28
  %v477 = vsub.f32 %v473, %v475
  %v478 = vsub.f32 %v474, %v476
  %v479 = vadd.f32 %v477, %v478
  %v480 = vrot.slane %v479, 4
  %v481 = vadd.f32 %v479, %v480
  %v482 = vrot.slane %v481, 2
  %v483 = vadd.f32 %v481, %v482
  %v484 = vrot.slane %v483, 1
  %v485 = vadd.f32 %v483, %v484
  %v486 = vmul.f32 %v439, %v27
  %v487 = vmul.f32 %v440, %v28
  %v488 = vmul.f32 %v442, %v15
  %v489 = vmul.f32 %v443, %v16
  %v490 = vadd.f32 %v486, %v488
  %v491 = vadd.f32 %v487, %v489
  %v492 = vadd.f32 %v490, %v491
  %v493 = vrot.slane %v492, 4
  %v494 = vadd.f32 %v492, %v493
  %v495 = vrot.slane %v494, 2
  %v496 = vadd.f32 %v494, %v495
  %v497 = vrot.slane %v496, 1
  %v498 = vadd.f32 %v496, %v497
  %v499 = vmul.f32 %v485, %v485
  %v500 = vmul.f32 %v498, %v498
  %v501 = vadd.f32 %v499, %v500
  %v502 = vadd.f32 %v472, %v501
  %v503 = vmul.f32 %v439, %v18
  %v504 = vmul.f32 %v440, %v19
  %v505 = vmul.f32 %v442, %v30
  %v506 = vmul.f32 %v443, %v31
  %v507 = vsub.f32 %v503, %v505
  %v508 = vsub.f32 %v504, %v506
  %v509 = vadd.f32 %v507, %v508
  %v510 = vrot.slane %v509, 4
  %v511 = vadd.f32 %v509, %v510
  %v512 = vrot.slane %v511, 2
  %v513 = vadd.f32 %v511, %v512
  %v514 = vrot.slane %v513, 1
  %v515 = vadd.f32 %v513, %v514
  %v516 = vmul.f32 %v439, %v30
  %v517 = vmul.f32 %v440, %v31
  %v518 = vmul.f32 %v442, %v18
  %v519 = vmul.f32 %v443, %v19
  %v520 = vadd.f32 %v516, %v518
  %v521 = vadd.f32 %v517, %v519
  %v522 = vadd.f32 %v520, %v521
  %v523 = vrot.slane %v522, 4
  %v524 = vadd.f32 %v522, %v523
  %v525 = vrot.slane %v524, 2
  %v526 = vadd.f32 %v524, %v525
  %v527 = vrot.slane %v526, 1
  %v528 = vadd.f32 %v526, %v527
  %v529 = vmul.f32 %v515, %v515
  %v530 = vmul.f32 %v528, %v528
  %v531 = vadd.f32 %v529, %v530
  %v532 = vadd.f32 %v502, %v531
  %v533 = vmul.f32 %v439, %v21
  %v534 = vmul.f32 %v440, %v22
  %v535 = vmul.f32 %v442, %v33
  %v536 = vmul.f32 %v443, %v34
  %v537 = vsub.f32 %v533, %v535
  %v538 = vsub.f32 %v534, %v536
  %v539 = vadd.f32 %v537, %v538
  %v540 = vrot.slane %v539, 4
  %v541 = vadd.f32 %v539, %v540
  %v542 = vrot.slane %v541, 2
  %v543 = vadd.f32 %v541, %v542
  %v544 = vrot.slane %v543, 1
  %v545 = vadd.f32 %v543, %v544
  %v546 = vmul.f32 %v439, %v33
  %v547 = vmul.f32 %v440, %v34
  %v548 = vmul.f32 %v442, %v21
  %v549 = vmul.f32 %v443, %v22
  %v550 = vadd.f32 %v546, %v548
  %v551 = vadd.f32 %v547, %v549
  %v552 = vadd.f32 %v550, %v551
  %v553 = vrot.slane %v552, 4
  %v554 = vadd.f32 %v552, %v553
  %v555 = vrot.slane %v554, 2
  %v556 = vadd.f32 %v554, %v555
  %v557 = vrot.slane %v556, 1
  %v558 = vadd.f32 %v556, %v557
  %v559 = vmul.f32 %v545, %v545
  %v560 = vmul.f32 %v558, %v558
  %v561 = vadd.f32 %v559, %v560
  %v562 = vadd.f32 %v532, %v561
  %v563 = vsub.f32 %v562, %v561
  %v564 = vadd.f32 %v563, %v160
  %v565 = vrcp.pop %v564
  %v566 = vmul.f32 %v561, %v565
  %v567 = vadd.f32 %v566, 1.0
  %v568 = vlog2.pop %v567
  %v569 = vmul.f32 %v568, 0.6931472
  %v570 = vmul.f32 %v569, %v167
  %v571 = vadd.f32 %v437, %v570
  %572 = vst [vmem:[%s2] sm:$0x1] %v571
  // Predicated region
  $region6: #{sum_rate_loss.1} parent=0 // pred_check
    _
  $region7: #{sum_rate_loss.1} parent=0 // pred_check_branch
    %574 = sbr.rel (0) target = $region9
  $region8: #{sum_rate_loss.1} parent=0 // pred_region
    _
  $region9: #{sum_rate_loss.1} parent=0 // pred_fallthru
    _
  // Predicated region
  $region10: #{sum_rate_loss.1} parent=0 // pred_check
    _
  $region11: #{sum_rate_loss.1} parent=0 // pred_check_branch
    %576 = sbr.rel (0) target = $region13
  $region12: #{sum_rate_loss.1} parent=0 // pred_region
    _
  $region13: #{sum_rate_loss.1} parent=0 // pred_fallthru
    _

</llo_original>
